<compile_context>
chip_gen: v5e
topology: v5e:2x2
jax: 0.10.0
libtpu: 0.0.40
codegen_flags: <defaults>
</compile_context>

<pallas_src>
import jax
import jax.numpy as jnp
from jax.experimental import pallas as pl
from jax.experimental.pallas import tpu as pltpu


def _subject_scale_kernel(x_ref, s_ref, o_ref):
    # x_ref: (1, tC, tT)  -- channels on sublanes, time on lanes (lane-dense).
    # s_ref: (1, tC, 1)   -- per-(batch, channel) scale, broadcast across lanes.
    # o_ref: (1, tC, tT)
    o_ref[...] = x_ref[...] * s_ref[...]


def _pick_tile(n: int, unit: int, cap: int) -> int:
    """Largest multiple of `unit` that divides n and is <= cap.

    Falls back to the full extent n, which is always a legal block dim
    (block == full array dim satisfies the (8, 128) constraint)."""
    if n <= cap or n % unit != 0:
        return n
    t = (cap // unit) * unit
    while t >= unit:
        if n % t == 0:
            return t
        t -= unit
    return n


def subject_layers_v2(x, subjects, emb_table, *, max_tt: int = 1024, max_tc: int = 512):
    """x: (B, T, C) float32; subjects: (B, C) int32; emb_table: (n_subjects, D).

    Returns (B, T, C), identical to torch.einsum('btc,bcd->btc', x, emb[subjects])."""
    B, T, C = x.shape

    # Glue (parameter math, done once in XLA): the sum over D distributes over the
    # gather, so only a (B, C) scale ever reaches the kernel.
    scale = jnp.sum(emb_table, axis=-1)[subjects]            # (B, C)
    scale3 = scale[:, :, None].astype(x.dtype)               # (B, C, 1)

    # Lane-dense layout: put T on lanes (layout plumbing in the wrapper).
    x_ct = jnp.swapaxes(x, 1, 2)                             # (B, C, T)

    # Tile sizes: sublane dim tC multiple of 8, lane dim tT multiple of 128
    # (or full extents), capped so double-buffered x + out stay small.
    tC = _pick_tile(C, 8, max_tc)
    tT = _pick_tile(T, 128, max_tt)
    grid = (B, C // tC, T // tT)                             # T innermost

    # Explicit VMEM budget with headroom (re-derived for v7x's 64 MiB VMEM):
    # x + out double-buffered plus the (lane-padded) scale tile, times 2 slack.
    itemsize = jnp.dtype(x.dtype).itemsize
    block_bytes = tC * tT * itemsize
    scale_bytes = tC * 128 * itemsize
    vmem_limit = int(min(64 * 2**20, max(8 * 2**20, 2 * (4 * block_bytes + 2 * scale_bytes))))

    out_ct = pl.pallas_call(
        _subject_scale_kernel,
        out_shape=jax.ShapeDtypeStruct((B, C, T), x.dtype),
        grid=grid,
        in_specs=[
            pl.BlockSpec((1, tC, tT), lambda b, ci, ti: (b, ci, ti)),
            pl.BlockSpec((1, tC, 1), lambda b, ci, ti: (b, ci, 0)),  # constant in T
        ],
        out_specs=pl.BlockSpec((1, tC, tT), lambda b, ci, ti: (b, ci, ti)),
        compiler_params=pltpu.CompilerParams(
            dimension_semantics=("parallel", "parallel", "parallel"),
            vmem_limit_bytes=vmem_limit,
        ),
    )(x_ct, scale3)

    return jnp.swapaxes(out_ct, 1, 2)                        # back to (B, T, C)


if __name__ == "__main__":
    key = jax.random.PRNGKey(0)
    k_emb, k_x, k_sub = jax.random.split(key, 3)

    # Small shapes consistent with the module's forward.
    B, T, C = 2, 128, 4        # batch, seq, channels
    n_subjects, D = 4, 32      # embedding table size, emb_dim

    emb_table = jax.random.normal(k_emb, (n_subjects, D), dtype=jnp.float32)
    x = jax.random.normal(k_x, (B, T, C), dtype=jnp.float32)
    subjects = jax.random.randint(k_sub, (B, C), 0, n_subjects, dtype=jnp.int32)

    out = subject_layers_v2(x, subjects, emb_table)
    out = jax.block_until_ready(out)

    # Pure-JAX reference (mirrors torch.einsum('btc,bcd->btc', x, emb[subjects])).
    ref = jnp.einsum('btc,bcd->btc', x, emb_table[subjects])
    assert out.shape == (B, T, C)
    assert jnp.allclose(out, ref, atol=1e-5, rtol=1e-5)

    # Second (still small) run that exercises the multi-tile grid path.
    B2, T2, C2 = 2, 512, 16
    x2 = jax.random.normal(k_x, (B2, T2, C2), dtype=jnp.float32)
    subjects2 = jax.random.randint(k_sub, (B2, C2), 0, n_subjects, dtype=jnp.int32)
    out2 = jax.block_until_ready(
        subject_layers_v2(x2, subjects2, emb_table, max_tt=128, max_tc=8))
    ref2 = jnp.einsum('btc,bcd->btc', x2, emb_table[subjects2])
    assert jnp.allclose(out2, ref2, atol=1e-5, rtol=1e-5)

    print("KERNEL_OK")
</pallas_src>

<mosaic_0001>
module attributes {stable_mosaic.version = 11 : i64} {
  func.func @_subject_scale_kernel(%arg0: i32, %arg1: i32, %arg2: i32, %arg3: memref<1x4x128xf32, #tpu.memory_space<vmem>>, %arg4: memref<1x4x1xf32, #tpu.memory_space<vmem>>, %arg5: memref<1x4x128xf32, #tpu.memory_space<vmem>>) attributes {dimension_semantics = [#tpu.dimension_semantics<parallel>, #tpu.dimension_semantics<parallel>, #tpu.dimension_semantics<parallel>], iteration_bounds = array<i64: 2, 1, 1>, scalar_prefetch = 0 : i64, scratch_operands = 0 : i64, tpu.core_type = #tpu.core_type<tc>, window_params = [{transform_indices = @transform_0, window_bounds = array<i64: 1, 4, 128>}, {transform_indices = @transform_1, window_bounds = array<i64: 1, 4, 1>}, {transform_indices = @transform_2, window_bounds = array<i64: 1, 4, 128>}]} {
    %c0 = arith.constant 0 : index
    %c0_0 = arith.constant 0 : index
    %c0_1 = arith.constant 0 : index
    %0 = vector.load %arg3[%c0, %c0_0, %c0_1] : memref<1x4x128xf32, #tpu.memory_space<vmem>>, vector<1x4x128xf32>
    %c0_2 = arith.constant 0 : index
    %c0_3 = arith.constant 0 : index
    %c0_4 = arith.constant 0 : index
    %1 = vector.load %arg4[%c0_2, %c0_3, %c0_4] : memref<1x4x1xf32, #tpu.memory_space<vmem>>, vector<1x4x1xf32>
    %2 = vector.broadcast %1 : vector<1x4x1xf32> to vector<1x4x128xf32>
    %3 = arith.mulf %0, %2 : vector<1x4x128xf32>
    %c0_5 = arith.constant 0 : index
    %c0_6 = arith.constant 0 : index
    %c0_7 = arith.constant 0 : index
    %4 = vector.load %arg5[%c0_5, %c0_6, %c0_7] : memref<1x4x128xf32, #tpu.memory_space<vmem>>, vector<1x4x128xf32>
    tpu.vector_store %arg5[%c0_5, %c0_6, %c0_7], %3 {strides = array<i32>} : memref<1x4x128xf32, #tpu.memory_space<vmem>>, vector<1x4x128xf32>,
    return
  }
  func.func @transform_0(%arg0: i32, %arg1: i32, %arg2: i32) -> (i32, i32, i32) {
    %c0_i32 = arith.constant 0 : i32
    return %arg0, %arg1, %arg2 : i32, i32, i32
  }
  func.func @transform_1(%arg0: i32, %arg1: i32, %arg2: i32) -> (i32, i32, i32) {
    %c0_i32 = arith.constant 0 : i32
    %c0_i32_0 = arith.constant 0 : i32
    return %arg0, %arg1, %c0_i32 : i32, i32, i32
  }
  func.func @transform_2(%arg0: i32, %arg1: i32, %arg2: i32) -> (i32, i32, i32) {
    %c0_i32 = arith.constant 0 : i32
    return %arg0, %arg1, %arg2 : i32, i32, i32
  }
}

</mosaic_0001>

<llo_original>
// kernel: tpu_custom_call.1
$region0: #{tpu_custom_call.1}
  #allocation0 [shape = 'u32[]', space=smem, size = 0x4, offset = 0x4, fixed_abs, tag = 'smem constant byte address 0x4 - core index']
  #allocation1 [shape = 'u32[72,128]{1,0:T(1,128)}', space=vmem, size = 0x9000, scoped, tag = 'internal scratch']
  %s0 = inlined_call_operand.vmem [shape: f32[2,4,128], index: 0, kind: input, shape index: {}]
  %s1 = inlined_call_operand.vmem [shape: f32[2,4,1], index: 1, kind: input, shape index: {}]
  %s2 = inlined_call_operand.hbm [shape: f32[2,4,128], index: 2, kind: output, shape index: {}]
  %s3 = sld [smem:[#allocation0]]
  $region41: #{tpu_custom_call.1} parent=0
    _
  %s5 = ssub.s32 1, %s3
  %s6 = scalar_select 0, %s5, %s3
  $region1: #{tpu_custom_call.1} parent=0
    #allocation2 [shape = 'u8[4096]{0}', space=vmem, size = 0x1000, scoped, tag = 'output window, operand 0']
    #allocation3 [shape = 's32[2]{0}', space=sflag, size = 0x8, scoped, tag = 'scoped memory for tpu_custom_call.1']
    %7 = vsyncpa [#allocation3], 0
    %s8 = scalar_lea.sflag [#allocation3], 1
    %9 = vsyncpa %s8, 0
    loop: start=0, step=1, limit=4
    $region2: #{tpu_custom_call.1} parent=1 // loop_pre_header
      _
    $region3: #{tpu_custom_call.1} parent=1 // loop_header
      %s11 = sphi 0, %s15
      %p12 = scmp.ge.s32.totalorder %s11, 4
      %s18 = sphi 0, %s37
      %s19 = sphi 0, %s33
      %s20 = sphi 0, %s29
      %s21 = sphi 0, %s18
      %s22 = sphi 0, %s19
      %s23 = sphi 0, %s20
      %s24 = sphi 0, %s21
      %s25 = sphi 0, %s22
      %s26 = sphi 0, %s23
      %s44 = sphi 0, %s46
      %s47 = sphi 0, %s44
      %s48 = sphi 0, %s47
      %s64 = sphi 0, %s48
      %s72 = sphi 0, %s74
      %s75 = sphi 0, %s72
      %s76 = sphi 0, %s75
      %s92 = sphi 0, %s76
      %s102 = sphi 0, %s104
      %s105 = sphi 0, %s102
      %s106 = sphi 0, %s105
      %s122 = sphi 0, %s106
    $region4: #{tpu_custom_call.1} parent=1 // loop_header_branch
      %14 = sbr.rel (%p12) target = $region8
    $region5: #{tpu_custom_call.1} parent=1 // loop_body
      %s16 = ssub.s32 %s11, 1
      %s17 = ssub.s32 %s11, 2
      %s27 = sadd.s32 1, %s20
      %p28 = scmp.ge.s32.totalorder %s27, 1
      %s29 = scalar_select %p28, 0, %s27
      %s30 = sadd.s32 1, %s19
      %s31 = scalar_select %p28, %s30, %s19
      %p32 = scmp.ge.s32.totalorder %s31, 1
      %s33 = scalar_select %p32, 0, %s31
      %s34 = sadd.s32 1, %s18
      %s35 = scalar_select %p32, %s34, %s18
      %p36 = scmp.ge.s32.totalorder %s35, 2
      %s37 = scalar_select %p36, 0, %s35
      %s38 = ssub.s32 %s18, %s37
      %s39 = ssub.s32 %s19, %s33
      %s40 = sor.u32 %s38, %s39
      %s41 = ssub.s32 %s20, %s29
      %s42 = sor.u32 %s40, %s41
      %p43 = scmp.eq.s32.totalorder %s42, 0
      %s45 = sadd.s32 %s44, 1
      %s46 = scalar_select %p43, %s44, %s45
      %p49 = pneg %p43
      %p50 = scmp.eq.s32.totalorder %s11, 1
      %p51 = por %p49, %p50
      %p52 = scmp.ne.s32.totalorder %s44, %s47
      %p53 = scmp.eq.s32.totalorder %s11, 0
      %p54 = por %p52, %p53
      %p55 = scmp.ne.s32.totalorder %s44, %s47
      %p56 = scmp.eq.s32.totalorder %s16, 1
      %p57 = por %p55, %p56
      %p58 = scmp.ne.s32.totalorder %s47, %s48
      %p59 = scmp.eq.s32.totalorder %s16, 0
      %p60 = por %p58, %p59
      %p61 = scmp.ne.s32.totalorder %s47, %s48
      %p62 = scmp.eq.s32.totalorder %s17, 1
      %p63 = por %p61, %p62
      %p65 = scmp.ne.s32.totalorder %s48, %s64
      %p66 = scmp.eq.s32.totalorder %s17, 0
      %p67 = por %p65, %p66
      %s68 = ssub.s32 %s18, %s37
      %s69 = ssub.s32 %s19, %s33
      %s70 = sor.u32 %s68, %s69
      %p71 = scmp.eq.s32.totalorder %s70, 0
      %s73 = sadd.s32 %s72, 1
      %s74 = scalar_select %p71, %s72, %s73
      %p77 = pneg %p71
      %p78 = scmp.eq.s32.totalorder %s11, 1
      %p79 = por %p77, %p78
      %p80 = scmp.ne.s32.totalorder %s72, %s75
      %p81 = scmp.eq.s32.totalorder %s11, 0
      %p82 = por %p80, %p81
      %p83 = scmp.ne.s32.totalorder %s72, %s75
      %p84 = scmp.eq.s32.totalorder %s16, 1
      %p85 = por %p83, %p84
      %p86 = scmp.ne.s32.totalorder %s75, %s76
      %p87 = scmp.eq.s32.totalorder %s16, 0
      %p88 = por %p86, %p87
      %p89 = scmp.ne.s32.totalorder %s75, %s76
      %p90 = scmp.eq.s32.totalorder %s17, 1
      %p91 = por %p89, %p90
      %p93 = scmp.ne.s32.totalorder %s76, %s92
      %p94 = scmp.eq.s32.totalorder %s17, 0
      %p95 = por %p93, %p94
      %s96 = ssub.s32 %s18, %s37
      %s97 = ssub.s32 %s19, %s33
      %s98 = sor.u32 %s96, %s97
      %s99 = ssub.s32 %s20, %s29
      %s100 = sor.u32 %s98, %s99
      %p101 = scmp.eq.s32.totalorder %s100, 0
      %s103 = sadd.s32 %s102, 1
      %s104 = scalar_select %p101, %s102, %s103
      %p107 = pneg %p101
      %p108 = scmp.eq.s32.totalorder %s11, 1
      %p109 = por %p107, %p108
      %p110 = scmp.ne.s32.totalorder %s102, %s105
      %p111 = scmp.eq.s32.totalorder %s11, 0
      %p112 = por %p110, %p111
      %p113 = scmp.ne.s32.totalorder %s102, %s105
      %p114 = scmp.eq.s32.totalorder %s16, 1
      %p115 = por %p113, %p114
      %p116 = scmp.ne.s32.totalorder %s105, %s106
      %p117 = scmp.eq.s32.totalorder %s16, 0
      %p118 = por %p116, %p117
      %p119 = scmp.ne.s32.totalorder %s105, %s106
      %p120 = scmp.eq.s32.totalorder %s17, 1
      %p121 = por %p119, %p120
      %p123 = scmp.ne.s32.totalorder %s106, %s122
      %p124 = scmp.eq.s32.totalorder %s17, 0
      %p125 = por %p123, %p124
      %p126 = scmp.le.s32.totalorder 1, %s11
      %p127 = scmp.lt.s32.totalorder %s11, 3
      %p128 = pnand %p126, %p127
      %p129 = pneg %p128
      // Predicated region
      $region9: #{tpu_custom_call.1} parent=5 // pred_check
        _
      $region10: #{tpu_custom_call.1} parent=5 // pred_check_branch
        %131 = sbr.rel (%p128) target = $region12
      $region11: #{tpu_custom_call.1} parent=5 // pred_region
        %s132 = ssub.s32 %s11, 1
      $region12: #{tpu_custom_call.1} parent=5 // pred_fallthru
        _
      %p133 = scmp.lt.s32.totalorder %s11, 2
      // Predicated region
      $region13: #{tpu_custom_call.1} parent=5 // pred_check
        %p134 = pneg %p133
      $region14: #{tpu_custom_call.1} parent=5 // pred_check_branch
        %136 = sbr.rel (%p134) target = $region16
      $region15: #{tpu_custom_call.1} parent=5 // pred_region
        // Predicated region
        $region17: #{tpu_custom_call.1} parent=15 // pred_check
          %p137 = pneg %p54
        $region18: #{tpu_custom_call.1} parent=15 // pred_check_branch
          %139 = sbr.rel (%p137) target = $region20
        $region19: #{tpu_custom_call.1} parent=15 // pred_region
          %p140 = scmp.lt.s32.totalorder %s18, 1
          %s141 = scalar_select %p140, %s18, 1
          %p142 = scmp.lt.s32.totalorder %s19, 0
          %s143 = scalar_select %p142, %s19, 0
          %p144 = scmp.lt.s32.totalorder %s20, 0
          %s145 = scalar_select %p144, %s20, 0
          %s146 = sadd.s32 %s145, %s143
          %s147 = sadd.s32 %s146, %s141
          %s148 = smul.addr %s147, 4
          %s149 = scalar_lea.vmem %s0, %s148
        $region20: #{tpu_custom_call.1} parent=15 // pred_fallthru
          _
        // Predicated region
        $region21: #{tpu_custom_call.1} parent=15 // pred_check
          %p150 = pneg %p82
        $region22: #{tpu_custom_call.1} parent=15 // pred_check_branch
          %152 = sbr.rel (%p150) target = $region24
        $region23: #{tpu_custom_call.1} parent=15 // pred_region
          %p153 = scmp.lt.s32.totalorder %s18, 1
          %s154 = scalar_select %p153, %s18, 1
          %p155 = scmp.lt.s32.totalorder %s19, 0
          %s156 = scalar_select %p155, %s19, 0
          %s157 = sadd.s32 %s156, %s154
          %s158 = smul.addr %s157, 4
          %s159 = scalar_lea.vmem %s1, %s158
        $region24: #{tpu_custom_call.1} parent=15 // pred_fallthru
          _
      $region16: #{tpu_custom_call.1} parent=5 // pred_fallthru
        _
      %p160 = scmp.le.s32.totalorder 1, %s11
      %p161 = scmp.lt.s32.totalorder %s11, 3
      %p162 = pnand %p160, %p161
      %p163 = pneg %p162
      // Predicated region
      $region25: #{tpu_custom_call.1} parent=5 // pred_check
        _
      $region26: #{tpu_custom_call.1} parent=5 // pred_check_branch
        %165 = sbr.rel (%p162) target = $region28
      $region27: #{tpu_custom_call.1} parent=5 // pred_region
        %s166 = ssub.s32 %s11, 1
        %p167 = scmp.lt.s32.totalorder %s21, 1
        %s168 = scalar_select %p167, %s21, 1
        %p169 = scmp.lt.s32.totalorder %s22, 0
        %s170 = scalar_select %p169, %s22, 0
        %p171 = scmp.lt.s32.totalorder %s23, 0
        %s172 = scalar_select %p171, %s23, 0
        %s173 = sadd.s32 %s172, %s170
        %s174 = sadd.s32 %s173, %s168
        %s175 = smul.addr %s174, 4
        %s176 = scalar_lea.vmem %s0, %s175
        %p177 = pneg %p60
        %p178 = pneg %p57
        %p179 = scmp.lt.s32.totalorder %s21, 1
        %s180 = scalar_select %p179, %s21, 1
        %p181 = scmp.lt.s32.totalorder %s22, 0
        %s182 = scalar_select %p181, %s22, 0
        %s183 = sadd.s32 %s182, %s180
        %s184 = smul.addr %s183, 4
        %s185 = scalar_lea.vmem %s1, %s184
        %p186 = pneg %p88
        %p187 = pneg %p85
        %p188 = pneg %p118
        %p189 = pneg %p115
        %s190 = sand.u32 %s105, 1
        %s191 = scalar_lea.sflag [#allocation3], %s190
        %s192 = sand.u32 %s105, 1
        %s193 = smul.addr %s192, 4
        %s194 = scalar_lea.vmem [#allocation2], %s193
        %p195 = scmp.lt.s32.totalorder %s21, 1
        %s196 = scalar_select %p195, %s21, 1
        %p197 = scmp.lt.s32.totalorder %s22, 0
        %s198 = scalar_select %p197, %s22, 0
        %p199 = scmp.lt.s32.totalorder %s23, 0
        %s200 = scalar_select %p199, %s23, 0
        %s201 = sadd.s32 %s200, %s198
        %s202 = sadd.s32 %s201, %s196
        %s203 = smul.addr %s202, 4
        %s204 = scalar_lea.vmem %s0, %s203
        %p205 = scmp.lt.s32.totalorder %s21, 1
        %s206 = scalar_select %p205, %s21, 1
        %p207 = scmp.lt.s32.totalorder %s22, 0
        %s208 = scalar_select %p207, %s22, 0
        %s209 = sadd.s32 %s208, %s206
        %s210 = smul.addr %s209, 4
        %s211 = scalar_lea.vmem %s1, %s210
        %v212 = vld [vmem:[%s204] sm:$0xf]
        %v213 = vld [vmem:[%s211] sm:$0xf]
        %215 = vset.pattern.permute.xlu0 0
        %216 = vperm.xlu0 %215, %v213
        %v217 = vpop.permute.xlu0 %216
        %v219 = vmul.f32 %v212, %v217
        %220 = vst [vmem:[%s194] sm:$0xf] %v219
        %s221 = sand.u32 %s105, 1
        %s222 = scalar_lea.sflag [#allocation3], %s221
        %s223 = sand.u32 %s105, 1
        %s224 = smul.addr %s223, 4
        %s225 = scalar_lea.vmem [#allocation2], %s224
        // Predicated region
        $region29: #{tpu_custom_call.1} parent=27 // pred_check
          %p226 = pneg %p115
        $region30: #{tpu_custom_call.1} parent=27 // pred_check_branch
          %228 = sbr.rel (%p226) target = $region32
        $region31: #{tpu_custom_call.1} parent=27 // pred_region
          %230 = vsyncadd %s222, 0
          %s231 = sadd.s32 %s23, %s22
          %s232 = sadd.s32 %s231, %s21
          %s233 = smul.addr %s232, 4
          %s234 = scalar_lea.hbm %s2, %s233
          %s236 = sshll.u32 %s225, 4
          %s237 = int_to_ptr.vmem [resolvable:$true] %s236
          %s238 = sshll.u32 %s234, 4
          %s239 = int_to_ptr.hbm [resolvable:$true] %s238
          %241 = dma.vmem_to_hbm [thread:$0]  %s237, 64, %s239, %s222
        $region32: #{tpu_custom_call.1} parent=27 // pred_fallthru
          _
      $region28: #{tpu_custom_call.1} parent=5 // pred_fallthru
        _
      %p242 = scmp.le.s32.totalorder 2, %s11
      // Predicated region
      $region33: #{tpu_custom_call.1} parent=5 // pred_check
        %p243 = pneg %p242
      $region34: #{tpu_custom_call.1} parent=5 // pred_check_branch
        %245 = sbr.rel (%p243) target = $region36
      $region35: #{tpu_custom_call.1} parent=5 // pred_region
        %s246 = ssub.s32 %s11, 2
        // Predicated region
        $region37: #{tpu_custom_call.1} parent=35 // pred_check
          %p247 = pneg %p121
        $region38: #{tpu_custom_call.1} parent=35 // pred_check_branch
          %249 = sbr.rel (%p247) target = $region40
        $region39: #{tpu_custom_call.1} parent=35 // pred_region
          %s250 = sand.u32 %s106, 1
          %s251 = scalar_lea.sflag [#allocation3], %s250
          %s252 = sand.u32 %s106, 1
          %s253 = smul.addr %s252, 4
          %s254 = scalar_lea.vmem [#allocation2], %s253
          %256 = dma.done %s251, 64
        $region40: #{tpu_custom_call.1} parent=35 // pred_fallthru
          _
      $region36: #{tpu_custom_call.1} parent=5 // pred_fallthru
        _
    $region6: #{tpu_custom_call.1} parent=1 // loop_footer
      %s15 = sadd.s32 1, %s11
    $region7: #{tpu_custom_call.1} parent=1 // loop_footer_branch
      %10 = sbr.rel target = $region3
    $region8: #{tpu_custom_call.1} parent=1 // loop_exit
      _
    %257 = vsyncpa [#allocation3], 1
    %s258 = scalar_lea.sflag [#allocation3], 1
    %259 = vsyncpa %s258, 1

</llo_original>
